<compile_context>
chip_gen: v7x
topology: tpu7x:2x2x1
jax: 0.10.0
libtpu: 0.0.40
codegen_flags: <defaults>
</compile_context>

<pallas_src>
import jax
import jax.numpy as jnp
from jax import lax
from jax.experimental import pallas as pl
from jax.experimental.pallas import tpu as pltpu
import numpy as np


def _make_wec_kernel(acc_into_out: bool, mxu_dtype):
    """Build the per-(batch, edge-block) kernel body.

    acc_into_out: accumulate directly into out_ref (valid when out dtype is f32);
                  otherwise use a separate f32 VMEM scratch and cast at the end.
    mxu_dtype:    dtype of the one-hot / feature operands fed to the MXU
                  (bf16 for full MXU rate, f32 for exact-match with f32 inputs).
    """

    def kernel(src_ref, dst_ref, ew_ref, x_ref, out_ref, *scratch):
        # src_ref : (TE, 1) int32  -- gather indices (sublane-major)
        # dst_ref : (1, TE) int32  -- scatter indices (lane-major)
        # ew_ref  : (TE, 1) f32    -- edge weights
        # x_ref   : (N, C)         -- node features of current batch element
        # out_ref : (N, C)         -- output node features
        acc_ref = out_ref if acc_into_out else scratch[0]
        e_blk = pl.program_id(1)

        @pl.when(e_blk == 0)
        def _():
            acc_ref[...] = jnp.zeros(acc_ref.shape, acc_ref.dtype)

        N = x_ref.shape[0]
        TE = src_ref.shape[0]

        # Gather via one-hot matmul: G[e, n] = (n == src[e]).  0/1 is exact in bf16.
        # Padded edges carry the sentinel index N -> all-zero row -> zero contribution.
        node_ids_g = lax.broadcasted_iota(jnp.int32, (TE, N), 1)
        gmat = (node_ids_g == src_ref[...]).astype(mxu_dtype)            # (TE, N)
        gathered = jnp.dot(gmat, x_ref[...].astype(mxu_dtype),
                           preferred_element_type=jnp.float32)           # (TE, C) f32

        # Edge-weight scaling on the VPU (f32), kept out of the MXU operand path.
        weighted = gathered * ew_ref[...]                                # (TE, C) f32

        # Scatter via one-hot matmul: S[n, e] = (n == dst[e]).
        node_ids_s = lax.broadcasted_iota(jnp.int32, (N, TE), 0)
        smat = (node_ids_s == dst_ref[...]).astype(mxu_dtype)            # (N, TE)
        acc_ref[...] += jnp.dot(smat, weighted.astype(mxu_dtype),
                                preferred_element_type=jnp.float32)      # (N, C) f32

        if not acc_into_out:
            @pl.when(e_blk == pl.num_programs(1) - 1)
            def _():
                out_ref[...] = acc_ref[...].astype(out_ref.dtype)

    return kernel


def weighted_edge_conv(x, g, ew, aggregating=True, *, edge_block=256, mxu_dtype=None):
    """Pallas implementation of WeightedEdgeConv.forward."""
    squeeze = (x.ndim == 2)
    if squeeze:
        x = x[None]                          # promote [N, C] -> [1, N, C]
    B, N, C = x.shape
    E = g.shape[1]

    # E == 0: edge grid axis would be empty and out never written; match reference.
    if E == 0:
        out = jnp.zeros((B, N, C), x.dtype)
        return out[0] if squeeze else out

    i, j = g[0], g[1]
    if aggregating:
        src, dst = i, j                      # gather at i, scatter to j
    else:
        src, dst = j, i                      # gather at j, scatter to i
    src = src.astype(jnp.int32)
    dst = dst.astype(jnp.int32)
    ew = ew.astype(jnp.float32)              # accumulation / weighting stays f32

    if mxu_dtype is None:
        # bf16 MXU only when the inputs are already bf16 (one-hots are exact in
        # bf16; f32 inputs keep f32 operands so results match the f32 reference).
        mxu_dtype = jnp.bfloat16 if x.dtype == jnp.bfloat16 else x.dtype

    # Pad channel dim to a lane-dense multiple of 128 (skipped when already aligned).
    C_pad = ((C + 127) // 128) * 128
    if C_pad != C:
        x = jnp.pad(x, ((0, 0), (0, 0), (0, C_pad - C)))

    # Tile the edge axis; pad with out-of-range node id N (matches no one-hot row)
    # and zero weight so padded edges contribute nothing.
    edge_block = max(128, ((edge_block + 127) // 128) * 128)
    edge_block = min(edge_block, max(128, ((E + 127) // 128) * 128))
    num_blocks = pl.cdiv(E, edge_block)
    E_pad = num_blocks * edge_block
    pad = E_pad - E
    src_p = jnp.pad(src, (0, pad), constant_values=N).reshape(E_pad, 1)
    dst_p = jnp.pad(dst, (0, pad), constant_values=N).reshape(1, E_pad)
    ew_p = jnp.pad(ew, (0, pad), constant_values=0.0).reshape(E_pad, 1)

    # f32 output -> accumulate directly into out_ref (no f32 scratch, no final copy).
    acc_into_out = (x.dtype == jnp.float32)
    kernel = _make_wec_kernel(acc_into_out, mxu_dtype)
    scratch_shapes = [] if acc_into_out else [pltpu.VMEM((N, C_pad), jnp.float32)]

    cost = pl.CostEstimate(
        flops=4 * B * E_pad * N * C_pad,                      # two MXU passes / block
        transcendentals=0,
        bytes_accessed=B * (2 * N * C_pad * x.dtype.itemsize + E_pad * 12),
    )

    out = pl.pallas_call(
        kernel,
        out_shape=jax.ShapeDtypeStruct((B, N, C_pad), x.dtype),
        grid=(B, num_blocks),
        in_specs=[
            pl.BlockSpec((edge_block, 1), lambda b, e: (e, 0)),      # src (sublane-major)
            pl.BlockSpec((1, edge_block), lambda b, e: (0, e)),      # dst (lane-major)
            pl.BlockSpec((edge_block, 1), lambda b, e: (e, 0)),      # ew  (sublane-major)
            pl.BlockSpec((None, N, C_pad), lambda b, e: (b, 0, 0)),  # x (per batch)
        ],
        out_specs=pl.BlockSpec((None, N, C_pad), lambda b, e: (b, 0, 0)),
        scratch_shapes=scratch_shapes,
        compiler_params=pltpu.CompilerParams(
            dimension_semantics=("parallel", "arbitrary")),
        cost_estimate=cost,
    )(src_p, dst_p, ew_p, x)

    if C_pad != C:
        out = out[..., :C]
    if squeeze:
        out = out[0]
    return out


def cal_ew(w, g, num_nodes):
    """Plain-JAX port of WeightedEdgeConv.cal_ew (a @no_grad preprocessing helper)."""
    i, j = g[0], g[1]
    deg = jnp.zeros((num_nodes,), jnp.float32).at[i].add(1.0)
    normed_w = w.squeeze(-1) / deg
    w_to_send = normed_w[i]
    eps = 1e-12
    aggr_w = jnp.zeros((num_nodes,), jnp.float32).at[j].add(w_to_send) + eps
    ec = w_to_send / aggr_w[j]
    return ec, aggr_w


def _reference_forward(x, g, ew, aggregating=True):
    """Pure-JAX reference matching the PyTorch semantics (for a sanity check)."""
    i, j = g[0], g[1]
    squeeze = (x.ndim == 2)
    if squeeze:
        x = x[None]
    if aggregating:
        weighted = x[:, i, :] * ew[None, :, None]
        tgt = j
    else:
        weighted = x[:, j, :] * ew[None, :, None]
        tgt = i
    out = jnp.zeros_like(x).at[:, tgt, :].add(weighted)
    if squeeze:
        out = out[0]
    return out


if __name__ == "__main__":
    key = jax.random.PRNGKey(0)
    kx, kg0, kg1, kw, kx2 = jax.random.split(key, 5)

    B, N, C, E = 2, 16, 128, 64
    x = jax.random.normal(kx, (B, N, C), dtype=jnp.float32)
    g = jnp.stack([
        jax.random.randint(kg0, (E,), 0, N, dtype=jnp.int32),
        jax.random.randint(kg1, (E,), 0, N, dtype=jnp.int32),
    ])
    node_w = jax.random.uniform(kw, (N, 1), dtype=jnp.float32) + 0.1

    # Edge weights via the module's own cal_ew helper (deterministic, in-script).
    ew, _aggr_w = cal_ew(node_w, g, N)

    # Down pass (aggregating=True) and up pass (aggregating=False) -- f32 path.
    out_down = jax.block_until_ready(weighted_edge_conv(x, g, ew, aggregating=True))
    out_up = jax.block_until_ready(weighted_edge_conv(x, g, ew, aggregating=False))
    np.testing.assert_allclose(np.asarray(out_down),
                               np.asarray(_reference_forward(x, g, ew, True)),
                               rtol=1e-5, atol=1e-5)
    np.testing.assert_allclose(np.asarray(out_up),
                               np.asarray(_reference_forward(x, g, ew, False)),
                               rtol=1e-5, atol=1e-5)

    # 2-D input with unaligned channel count (exercises padding + squeeze path).
    x2 = jax.random.normal(kx2, (N, 32), dtype=jnp.float32)
    out2 = jax.block_until_ready(weighted_edge_conv(x2, g, ew, aggregating=True))
    np.testing.assert_allclose(np.asarray(out2),
                               np.asarray(_reference_forward(x2, g, ew, True)),
                               rtol=1e-5, atol=1e-5)

    # bf16 path (bf16 one-hots + operands on the MXU, f32 accumulation).
    x_bf = x.astype(jnp.bfloat16)
    out_bf = jax.block_until_ready(weighted_edge_conv(x_bf, g, ew, aggregating=True))
    ref_bf = _reference_forward(x_bf.astype(jnp.float32), g, ew, True)
    np.testing.assert_allclose(np.asarray(out_bf, dtype=np.float32),
                               np.asarray(ref_bf),
                               rtol=5e-2, atol=5e-2)

    print("KERNEL_OK")
</pallas_src>

<mosaic_0001>
module attributes {stable_mosaic.version = 11 : i64} {
  func.func @kernel(%arg0: i32, %arg1: i32, %arg2: memref<128x1xi32, #tpu.memory_space<vmem>>, %arg3: memref<1x128xi32, #tpu.memory_space<vmem>>, %arg4: memref<128x1xf32, #tpu.memory_space<vmem>>, %arg5: memref<1x16x128xf32, #tpu.memory_space<vmem>>, %arg6: memref<1x16x128xf32, #tpu.memory_space<vmem>>) attributes {dimension_semantics = [#tpu.dimension_semantics<parallel>, #tpu.dimension_semantics<arbitrary>], iteration_bounds = array<i64: 2, 1>, scalar_prefetch = 0 : i64, scratch_operands = 0 : i64, tpu.core_type = #tpu.core_type<tc>, window_params = [{transform_indices = @transform_0, window_bounds = array<i64: 128, 1>}, {transform_indices = @transform_1, window_bounds = array<i64: 1, 128>}, {transform_indices = @transform_2, window_bounds = array<i64: 128, 1>}, {transform_indices = @transform_3, window_bounds = array<i64: 1, 16, 128>}, {transform_indices = @transform_4, window_bounds = array<i64: 1, 16, 128>}]} {
    %c0_i32 = arith.constant 0 : i32
    %0 = arith.cmpi eq, %arg1, %c0_i32 : i32
    %1 = arith.extui %0 : i1 to i32
    %c0_i32_0 = arith.constant 0 : i32
    %2 = arith.cmpi ne, %1, %c0_i32_0 : i32
    scf.if %2 {
      %cst_16 = arith.constant 0.000000e+00 : f32
      %28 = vector.broadcast %cst_16 : f32 to vector<16x128xf32>
      %c0_17 = arith.constant 0 : index
      %c0_18 = arith.constant 0 : index
      %c0_19 = arith.constant 0 : index
      %29 = vector.load %arg6[%c0_17, %c0_18, %c0_19] : memref<1x16x128xf32, #tpu.memory_space<vmem>>, vector<1x16x128xf32>
      %30 = vector.shape_cast %29 : vector<1x16x128xf32> to vector<16x128xf32>
      %31 = vector.shape_cast %28 : vector<16x128xf32> to vector<1x16x128xf32>
      tpu.vector_store %arg6[%c0_17, %c0_18, %c0_19], %31 {strides = array<i32>} : memref<1x16x128xf32, #tpu.memory_space<vmem>>, vector<1x16x128xf32>,
    } else {
    }
    %3 = tpu.iota {dimensions = array<i32: 1>} : vector<128x16xi32>
    %c0 = arith.constant 0 : index
    %c0_1 = arith.constant 0 : index
    %4 = vector.load %arg2[%c0, %c0_1] : memref<128x1xi32, #tpu.memory_space<vmem>>, vector<128x1xi32>
    %5 = vector.broadcast %4 : vector<128x1xi32> to vector<128x16xi32>
    %6 = arith.cmpi eq, %3, %5 : vector<128x16xi32>
    %7 = arith.extui %6 : vector<128x16xi1> to vector<128x16xi32>
    %8 = arith.sitofp %7 : vector<128x16xi32> to vector<128x16xf32>
    %c0_2 = arith.constant 0 : index
    %c0_3 = arith.constant 0 : index
    %c0_4 = arith.constant 0 : index
    %9 = vector.load %arg5[%c0_2, %c0_3, %c0_4] : memref<1x16x128xf32, #tpu.memory_space<vmem>>, vector<1x16x128xf32>
    %10 = vector.shape_cast %9 : vector<1x16x128xf32> to vector<16x128xf32>
    %cst = arith.constant dense<0.000000e+00> : vector<128x128xf32>
    %11 = tpu.matmul %8, %10, %cst {dimension_numbers = #tpu.dot_dimension_numbers<[1], [0], [0], [1], [0, 0, 1, 1], [], []>} : vector<128x16xf32>, vector<16x128xf32>, vector<128x128xf32> -> vector<128x128xf32>
    %c0_5 = arith.constant 0 : index
    %c0_6 = arith.constant 0 : index
    %12 = vector.load %arg4[%c0_5, %c0_6] : memref<128x1xf32, #tpu.memory_space<vmem>>, vector<128x1xf32>
    %13 = vector.broadcast %12 : vector<128x1xf32> to vector<128x128xf32>
    %14 = arith.mulf %11, %13 : vector<128x128xf32>
    %15 = tpu.iota {dimensions = array<i32: 0>} : vector<16x128xi32>
    %c0_7 = arith.constant 0 : index
    %c0_8 = arith.constant 0 : index
    %16 = vector.load %arg3[%c0_7, %c0_8] : memref<1x128xi32, #tpu.memory_space<vmem>>, vector<1x128xi32>
    %17 = vector.broadcast %16 : vector<1x128xi32> to vector<16x128xi32>
    %18 = arith.cmpi eq, %15, %17 : vector<16x128xi32>
    %19 = arith.extui %18 : vector<16x128xi1> to vector<16x128xi32>
    %20 = arith.sitofp %19 : vector<16x128xi32> to vector<16x128xf32>
    %c0_9 = arith.constant 0 : index
    %c0_10 = arith.constant 0 : index
    %c0_11 = arith.constant 0 : index
    %21 = vector.load %arg6[%c0_9, %c0_10, %c0_11] : memref<1x16x128xf32, #tpu.memory_space<vmem>>, vector<1x16x128xf32>
    %22 = vector.shape_cast %21 : vector<1x16x128xf32> to vector<16x128xf32>
    %cst_12 = arith.constant dense<0.000000e+00> : vector<16x128xf32>
    %23 = tpu.matmul %20, %14, %cst_12 {dimension_numbers = #tpu.dot_dimension_numbers<[1], [0], [0], [1], [0, 0, 1, 1], [], []>} : vector<16x128xf32>, vector<128x128xf32>, vector<16x128xf32> -> vector<16x128xf32>
    %24 = arith.addf %22, %23 : vector<16x128xf32>
    %c0_13 = arith.constant 0 : index
    %c0_14 = arith.constant 0 : index
    %c0_15 = arith.constant 0 : index
    %25 = vector.load %arg6[%c0_13, %c0_14, %c0_15] : memref<1x16x128xf32, #tpu.memory_space<vmem>>, vector<1x16x128xf32>
    %26 = vector.shape_cast %25 : vector<1x16x128xf32> to vector<16x128xf32>
    %27 = vector.shape_cast %24 : vector<16x128xf32> to vector<1x16x128xf32>
    tpu.vector_store %arg6[%c0_13, %c0_14, %c0_15], %27 {strides = array<i32>} : memref<1x16x128xf32, #tpu.memory_space<vmem>>, vector<1x16x128xf32>,
    return
  }
  func.func @transform_0(%arg0: i32, %arg1: i32) -> (i32, i32) {
    %c0_i32 = arith.constant 0 : i32
    %c0_i32_0 = arith.constant 0 : i32
    return %arg1, %c0_i32 : i32, i32
  }
  func.func @transform_1(%arg0: i32, %arg1: i32) -> (i32, i32) {
    %c0_i32 = arith.constant 0 : i32
    %c0_i32_0 = arith.constant 0 : i32
    return %c0_i32, %arg1 : i32, i32
  }
  func.func @transform_2(%arg0: i32, %arg1: i32) -> (i32, i32) {
    %c0_i32 = arith.constant 0 : i32
    %c0_i32_0 = arith.constant 0 : i32
    return %arg1, %c0_i32 : i32, i32
  }
  func.func @transform_3(%arg0: i32, %arg1: i32) -> (i32, i32, i32) {
    %c0_i32 = arith.constant 0 : i32
    %c0_i32_0 = arith.constant 0 : i32
    %c0_i32_1 = arith.constant 0 : i32
    return %arg0, %c0_i32, %c0_i32_0 : i32, i32, i32
  }
  func.func @transform_4(%arg0: i32, %arg1: i32) -> (i32, i32, i32) {
    %c0_i32 = arith.constant 0 : i32
    %c0_i32_0 = arith.constant 0 : i32
    %c0_i32_1 = arith.constant 0 : i32
    return %arg0, %c0_i32, %c0_i32_0 : i32, i32, i32
  }
}

</mosaic_0001>

<llo_original>
// kernel: tpu_custom_call.1
$region0: #{tpu_custom_call.1}
  #allocation0 [shape = 'u32[]', space=smem, size = 0x4, offset = 0x4, fixed_abs, tag = 'smem constant byte address 0x4 - core index']
  #allocation1 [shape = 'u32[144,128]{1,0:T(1,128)}', space=vmem, size = 0x12000, scoped, tag = 'internal scratch']
  %s0 = inlined_call_operand.vmem [shape: s32[128,1], index: 0, kind: input, shape index: {}]
  %s1 = inlined_call_operand.vmem [shape: s32[1,128], index: 1, kind: input, shape index: {}]
  %s2 = inlined_call_operand.vmem [shape: f32[128,1], index: 2, kind: input, shape index: {}]
  %s3 = inlined_call_operand.vmem [shape: f32[2,16,128], index: 3, kind: input, shape index: {}]
  %s4 = inlined_call_operand.hbm [shape: f32[2,16,128], index: 4, kind: output, shape index: {}]
  %s5 = sld [smem:[#allocation0]]
  $region53: #{tpu_custom_call.1} parent=0
    _
  %s7 = ssub.s32 1, %s5
  %s8 = scalar_select 0, %s7, %s5
  $region1: #{tpu_custom_call.1} parent=0
    #allocation2 [shape = 'u8[16384]{0}', space=vmem, size = 0x4000, scoped, tag = 'output window, operand 0']
    #allocation3 [shape = 's32[2]{0}', space=sflag, size = 0x8, scoped, tag = 'scoped memory for tpu_custom_call.1']
    %9 = vsyncpa [#allocation3], 0
    %s10 = scalar_lea.sflag [#allocation3], 1
    %11 = vsyncpa %s10, 0
    loop: start=0, step=1, limit=4
    $region2: #{tpu_custom_call.1} parent=1 // loop_pre_header
      _
    $region3: #{tpu_custom_call.1} parent=1 // loop_header
      %s13 = sphi 0, %s17
      %p14 = scmp.ge.s32.totalorder %s13, 4
      %s20 = sphi 0, %s32
      %s21 = sphi 0, %s28
      %s22 = sphi 0, %s20
      %s23 = sphi 0, %s21
      %s24 = sphi 0, %s22
      %s25 = sphi 0, %s23
      %s35 = sphi 0, %s37
      %s38 = sphi 0, %s35
      %s39 = sphi 0, %s38
      %s55 = sphi 0, %s39
      %s61 = sphi 0, %s63
      %s64 = sphi 0, %s61
      %s65 = sphi 0, %s64
      %s81 = sphi 0, %s65
      %s87 = sphi 0, %s89
      %s90 = sphi 0, %s87
      %s91 = sphi 0, %s90
      %s107 = sphi 0, %s91
      %s113 = sphi 0, %s115
      %s116 = sphi 0, %s113
      %s117 = sphi 0, %s116
      %s133 = sphi 0, %s117
      %s139 = sphi 0, %s141
      %s142 = sphi 0, %s139
      %s143 = sphi 0, %s142
      %s159 = sphi 0, %s143
    $region4: #{tpu_custom_call.1} parent=1 // loop_header_branch
      %16 = sbr.rel (%p14) target = $region8
    $region5: #{tpu_custom_call.1} parent=1 // loop_body
      %s18 = ssub.s32 %s13, 1
      %s19 = ssub.s32 %s13, 2
      %s26 = sadd.s32 1, %s21
      %p27 = scmp.ge.s32.totalorder %s26, 1
      %s28 = scalar_select %p27, 0, %s26
      %s29 = sadd.s32 1, %s20
      %s30 = scalar_select %p27, %s29, %s20
      %p31 = scmp.ge.s32.totalorder %s30, 2
      %s32 = scalar_select %p31, 0, %s30
      %s33 = ssub.s32 %s21, %s28
      %p34 = scmp.eq.s32.totalorder %s33, 0
      %s36 = sadd.s32 %s35, 1
      %s37 = scalar_select %p34, %s35, %s36
      %p40 = pneg %p34
      %p41 = scmp.eq.s32.totalorder %s13, 1
      %p42 = por %p40, %p41
      %p43 = scmp.ne.s32.totalorder %s35, %s38
      %p44 = scmp.eq.s32.totalorder %s13, 0
      %p45 = por %p43, %p44
      %p46 = scmp.ne.s32.totalorder %s35, %s38
      %p47 = scmp.eq.s32.totalorder %s18, 1
      %p48 = por %p46, %p47
      %p49 = scmp.ne.s32.totalorder %s38, %s39
      %p50 = scmp.eq.s32.totalorder %s18, 0
      %p51 = por %p49, %p50
      %p52 = scmp.ne.s32.totalorder %s38, %s39
      %p53 = scmp.eq.s32.totalorder %s19, 1
      %p54 = por %p52, %p53
      %p56 = scmp.ne.s32.totalorder %s39, %s55
      %p57 = scmp.eq.s32.totalorder %s19, 0
      %p58 = por %p56, %p57
      %s59 = ssub.s32 %s21, %s28
      %p60 = scmp.eq.s32.totalorder %s59, 0
      %s62 = sadd.s32 %s61, 1
      %s63 = scalar_select %p60, %s61, %s62
      %p66 = pneg %p60
      %p67 = scmp.eq.s32.totalorder %s13, 1
      %p68 = por %p66, %p67
      %p69 = scmp.ne.s32.totalorder %s61, %s64
      %p70 = scmp.eq.s32.totalorder %s13, 0
      %p71 = por %p69, %p70
      %p72 = scmp.ne.s32.totalorder %s61, %s64
      %p73 = scmp.eq.s32.totalorder %s18, 1
      %p74 = por %p72, %p73
      %p75 = scmp.ne.s32.totalorder %s64, %s65
      %p76 = scmp.eq.s32.totalorder %s18, 0
      %p77 = por %p75, %p76
      %p78 = scmp.ne.s32.totalorder %s64, %s65
      %p79 = scmp.eq.s32.totalorder %s19, 1
      %p80 = por %p78, %p79
      %p82 = scmp.ne.s32.totalorder %s65, %s81
      %p83 = scmp.eq.s32.totalorder %s19, 0
      %p84 = por %p82, %p83
      %s85 = ssub.s32 %s21, %s28
      %p86 = scmp.eq.s32.totalorder %s85, 0
      %s88 = sadd.s32 %s87, 1
      %s89 = scalar_select %p86, %s87, %s88
      %p92 = pneg %p86
      %p93 = scmp.eq.s32.totalorder %s13, 1
      %p94 = por %p92, %p93
      %p95 = scmp.ne.s32.totalorder %s87, %s90
      %p96 = scmp.eq.s32.totalorder %s13, 0
      %p97 = por %p95, %p96
      %p98 = scmp.ne.s32.totalorder %s87, %s90
      %p99 = scmp.eq.s32.totalorder %s18, 1
      %p100 = por %p98, %p99
      %p101 = scmp.ne.s32.totalorder %s90, %s91
      %p102 = scmp.eq.s32.totalorder %s18, 0
      %p103 = por %p101, %p102
      %p104 = scmp.ne.s32.totalorder %s90, %s91
      %p105 = scmp.eq.s32.totalorder %s19, 1
      %p106 = por %p104, %p105
      %p108 = scmp.ne.s32.totalorder %s91, %s107
      %p109 = scmp.eq.s32.totalorder %s19, 0
      %p110 = por %p108, %p109
      %s111 = ssub.s32 %s20, %s32
      %p112 = scmp.eq.s32.totalorder %s111, 0
      %s114 = sadd.s32 %s113, 1
      %s115 = scalar_select %p112, %s113, %s114
      %p118 = pneg %p112
      %p119 = scmp.eq.s32.totalorder %s13, 1
      %p120 = por %p118, %p119
      %p121 = scmp.ne.s32.totalorder %s113, %s116
      %p122 = scmp.eq.s32.totalorder %s13, 0
      %p123 = por %p121, %p122
      %p124 = scmp.ne.s32.totalorder %s113, %s116
      %p125 = scmp.eq.s32.totalorder %s18, 1
      %p126 = por %p124, %p125
      %p127 = scmp.ne.s32.totalorder %s116, %s117
      %p128 = scmp.eq.s32.totalorder %s18, 0
      %p129 = por %p127, %p128
      %p130 = scmp.ne.s32.totalorder %s116, %s117
      %p131 = scmp.eq.s32.totalorder %s19, 1
      %p132 = por %p130, %p131
      %p134 = scmp.ne.s32.totalorder %s117, %s133
      %p135 = scmp.eq.s32.totalorder %s19, 0
      %p136 = por %p134, %p135
      %s137 = ssub.s32 %s20, %s32
      %p138 = scmp.eq.s32.totalorder %s137, 0
      %s140 = sadd.s32 %s139, 1
      %s141 = scalar_select %p138, %s139, %s140
      %p144 = pneg %p138
      %p145 = scmp.eq.s32.totalorder %s13, 1
      %p146 = por %p144, %p145
      %p147 = scmp.ne.s32.totalorder %s139, %s142
      %p148 = scmp.eq.s32.totalorder %s13, 0
      %p149 = por %p147, %p148
      %p150 = scmp.ne.s32.totalorder %s139, %s142
      %p151 = scmp.eq.s32.totalorder %s18, 1
      %p152 = por %p150, %p151
      %p153 = scmp.ne.s32.totalorder %s142, %s143
      %p154 = scmp.eq.s32.totalorder %s18, 0
      %p155 = por %p153, %p154
      %p156 = scmp.ne.s32.totalorder %s142, %s143
      %p157 = scmp.eq.s32.totalorder %s19, 1
      %p158 = por %p156, %p157
      %p160 = scmp.ne.s32.totalorder %s143, %s159
      %p161 = scmp.eq.s32.totalorder %s19, 0
      %p162 = por %p160, %p161
      %p163 = scmp.le.s32.totalorder 1, %s13
      %p164 = scmp.lt.s32.totalorder %s13, 3
      %p165 = pnand %p163, %p164
      %p166 = pneg %p165
      // Predicated region
      $region9: #{tpu_custom_call.1} parent=5 // pred_check
        _
      $region10: #{tpu_custom_call.1} parent=5 // pred_check_branch
        %168 = sbr.rel (%p165) target = $region12
      $region11: #{tpu_custom_call.1} parent=5 // pred_region
        %s169 = ssub.s32 %s13, 1
        // Predicated region
        $region13: #{tpu_custom_call.1} parent=11 // pred_check
          %p170 = pneg %p51
        $region14: #{tpu_custom_call.1} parent=11 // pred_check_branch
          %172 = sbr.rel (%p170) target = $region16
        $region15: #{tpu_custom_call.1} parent=11 // pred_region
          %s173 = smul.u32 16, %s23
          %p174 = scmp.lt.s32.totalorder %s173, 15
          %s175 = scalar_select %p174, %s173, 15
          %s176 = smul.addr %s175, 8
          %s177 = scalar_lea.vmem %s0, %s176
          %s178 = smul.u32 16, %s23
        $region16: #{tpu_custom_call.1} parent=11 // pred_fallthru
          _
        // Predicated region
        $region17: #{tpu_custom_call.1} parent=11 // pred_check
          %p179 = pneg %p77
        $region18: #{tpu_custom_call.1} parent=11 // pred_check_branch
          %181 = sbr.rel (%p179) target = $region20
        $region19: #{tpu_custom_call.1} parent=11 // pred_region
          %p182 = scmp.lt.s32.totalorder %s23, 0
          %s183 = scalar_select %p182, %s23, 0
          %s184 = scalar_lea.vmem %s1, %s183
        $region20: #{tpu_custom_call.1} parent=11 // pred_fallthru
          _
        // Predicated region
        $region21: #{tpu_custom_call.1} parent=11 // pred_check
          %p185 = pneg %p103
        $region22: #{tpu_custom_call.1} parent=11 // pred_check_branch
          %187 = sbr.rel (%p185) target = $region24
        $region23: #{tpu_custom_call.1} parent=11 // pred_region
          %s188 = smul.u32 16, %s23
          %p189 = scmp.lt.s32.totalorder %s188, 15
          %s190 = scalar_select %p189, %s188, 15
          %s191 = smul.addr %s190, 8
          %s192 = scalar_lea.vmem %s2, %s191
          %s193 = smul.u32 16, %s23
        $region24: #{tpu_custom_call.1} parent=11 // pred_fallthru
          _
      $region12: #{tpu_custom_call.1} parent=5 // pred_fallthru
        _
      %p194 = scmp.lt.s32.totalorder %s13, 2
      // Predicated region
      $region25: #{tpu_custom_call.1} parent=5 // pred_check
        %p195 = pneg %p194
      $region26: #{tpu_custom_call.1} parent=5 // pred_check_branch
        %197 = sbr.rel (%p195) target = $region28
      $region27: #{tpu_custom_call.1} parent=5 // pred_region
        // Predicated region
        $region29: #{tpu_custom_call.1} parent=27 // pred_check
          %p198 = pneg %p123
        $region30: #{tpu_custom_call.1} parent=27 // pred_check_branch
          %200 = sbr.rel (%p198) target = $region32
        $region31: #{tpu_custom_call.1} parent=27 // pred_region
          %p201 = scmp.lt.s32.totalorder %s20, 1
          %s202 = scalar_select %p201, %s20, 1
          %s203 = smul.addr %s202, 2
          %s204 = smul.addr %s203, 8
          %s205 = scalar_lea.vmem %s3, %s204
        $region32: #{tpu_custom_call.1} parent=27 // pred_fallthru
          _
      $region28: #{tpu_custom_call.1} parent=5 // pred_fallthru
        _
      %p206 = scmp.le.s32.totalorder 1, %s13
      %p207 = scmp.lt.s32.totalorder %s13, 3
      %p208 = pnand %p206, %p207
      %p209 = pneg %p208
      // Predicated region
      $region33: #{tpu_custom_call.1} parent=5 // pred_check
        _
      $region34: #{tpu_custom_call.1} parent=5 // pred_check_branch
        %211 = sbr.rel (%p208) target = $region36
      $region35: #{tpu_custom_call.1} parent=5 // pred_region
        %s212 = ssub.s32 %s13, 1
        %s213 = smul.u32 16, %s23
        %p214 = scmp.lt.s32.totalorder %s213, 15
        %s215 = scalar_select %p214, %s213, 15
        %s216 = smul.addr %s215, 8
        %s217 = scalar_lea.vmem %s0, %s216
        %p218 = pneg %p51
        %p219 = pneg %p48
        %p220 = scmp.lt.s32.totalorder %s23, 0
        %s221 = scalar_select %p220, %s23, 0
        %s222 = scalar_lea.vmem %s1, %s221
        %p223 = pneg %p77
        %p224 = pneg %p74
        %s225 = smul.u32 16, %s23
        %p226 = scmp.lt.s32.totalorder %s225, 15
        %s227 = scalar_select %p226, %s225, 15
        %s228 = smul.addr %s227, 8
        %s229 = scalar_lea.vmem %s2, %s228
        %p230 = pneg %p103
        %p231 = pneg %p100
        %p232 = scmp.lt.s32.totalorder %s22, 1
        %s233 = scalar_select %p232, %s22, 1
        %s234 = smul.addr %s233, 2
        %s235 = smul.addr %s234, 8
        %s236 = scalar_lea.vmem %s3, %s235
        %p237 = pneg %p129
        %p238 = pneg %p126
        %p239 = pneg %p155
        %p240 = pneg %p152
        %s241 = sand.u32 %s142, 1
        %s242 = scalar_lea.sflag [#allocation3], %s241
        %s243 = sand.u32 %s142, 1
        %s244 = smul.addr %s243, 16
        %s245 = scalar_lea.vmem [#allocation2], %s244
        %s246 = smul.u32 16, %s23
        %p247 = scmp.lt.s32.totalorder %s246, 15
        %s248 = scalar_select %p247, %s246, 15
        %s249 = smul.addr %s248, 8
        %s250 = scalar_lea.vmem %s0, %s249
        %s251 = smul.u32 16, %s23
        %p252 = scmp.lt.s32.totalorder %s23, 0
        %s253 = scalar_select %p252, %s23, 0
        %s254 = scalar_lea.vmem %s1, %s253
        %s255 = smul.u32 16, %s23
        %p256 = scmp.lt.s32.totalorder %s255, 15
        %s257 = scalar_select %p256, %s255, 15
        %s258 = smul.addr %s257, 8
        %s259 = scalar_lea.vmem %s2, %s258
        %s260 = smul.u32 16, %s23
        %p261 = scmp.lt.s32.totalorder %s22, 1
        %s262 = scalar_select %p261, %s22, 1
        %s263 = smul.addr %s262, 2
        %s264 = smul.addr %s263, 8
        %s265 = scalar_lea.vmem %s3, %s264
        %p266 = scmp.eq.s32.totalorder %s23, 0
        // Predicated region
        $region37: #{tpu_custom_call.1} parent=35 // pred_check
          %p267 = pneg %p266
        $region38: #{tpu_custom_call.1} parent=35 // pred_check_branch
          %269 = sbr.rel (%p267) target = $region40
        $region39: #{tpu_custom_call.1} parent=35 // pred_region
          %270 = vst [vmem:[%s245] sm:$0xff] 0.0
          %271 = vst [vmem:[%s245 + $0x8] sm:$0xff] 0.0
        $region40: #{tpu_custom_call.1} parent=35 // pred_fallthru
          _
        %v272 = vlaneseq
        %v273 = vand.u32 %v272, 127
        %v274 = vld [vmem:[%s250] sm:$0xff]
        %v275 = vld [vmem:[%s250 + $0x8] sm:$0xff]
        %v276 = vld [vmem:[%s250 + $0x10] sm:$0xff]
        %v277 = vld [vmem:[%s250 + $0x18] sm:$0xff]
        %v278 = vld [vmem:[%s250 + $0x20] sm:$0xff]
        %v279 = vld [vmem:[%s250 + $0x28] sm:$0xff]
        %v280 = vld [vmem:[%s250 + $0x30] sm:$0xff]
        %v281 = vld [vmem:[%s250 + $0x38] sm:$0xff]
        %v282 = vld [vmem:[%s250 + $0x40] sm:$0xff]
        %v283 = vld [vmem:[%s250 + $0x48] sm:$0xff]
        %v284 = vld [vmem:[%s250 + $0x50] sm:$0xff]
        %v285 = vld [vmem:[%s250 + $0x58] sm:$0xff]
        %v286 = vld [vmem:[%s250 + $0x60] sm:$0xff]
        %v287 = vld [vmem:[%s250 + $0x68] sm:$0xff]
        %v288 = vld [vmem:[%s250 + $0x70] sm:$0xff]
        %v289 = vld [vmem:[%s250 + $0x78] sm:$0xff]
        %290 = vset.pattern.permute.xlu0 0
        %291 = vperm.xlu0 %290, %v274
        %v292 = vpop.permute.xlu0 %291
        %293 = vset.pattern.permute.xlu0 0
        %294 = vperm.xlu0 %293, %v275
        %v295 = vpop.permute.xlu0 %294
        %296 = vset.pattern.permute.xlu0 0
        %297 = vperm.xlu0 %296, %v276
        %v298 = vpop.permute.xlu0 %297
        %299 = vset.pattern.permute.xlu0 0
        %300 = vperm.xlu0 %299, %v277
        %v301 = vpop.permute.xlu0 %300
        %302 = vset.pattern.permute.xlu0 0
        %303 = vperm.xlu0 %302, %v278
        %v304 = vpop.permute.xlu0 %303
        %305 = vset.pattern.permute.xlu0 0
        %306 = vperm.xlu0 %305, %v279
        %v307 = vpop.permute.xlu0 %306
        %308 = vset.pattern.permute.xlu0 0
        %309 = vperm.xlu0 %308, %v280
        %v310 = vpop.permute.xlu0 %309
        %311 = vset.pattern.permute.xlu0 0
        %312 = vperm.xlu0 %311, %v281
        %v313 = vpop.permute.xlu0 %312
        %314 = vset.pattern.permute.xlu0 0
        %315 = vperm.xlu0 %314, %v282
        %v316 = vpop.permute.xlu0 %315
        %317 = vset.pattern.permute.xlu0 0
        %318 = vperm.xlu0 %317, %v283
        %v319 = vpop.permute.xlu0 %318
        %320 = vset.pattern.permute.xlu0 0
        %321 = vperm.xlu0 %320, %v284
        %v322 = vpop.permute.xlu0 %321
        %323 = vset.pattern.permute.xlu0 0
        %324 = vperm.xlu0 %323, %v285
        %v325 = vpop.permute.xlu0 %324
        %326 = vset.pattern.permute.xlu0 0
        %327 = vperm.xlu0 %326, %v286
        %v328 = vpop.permute.xlu0 %327
        %329 = vset.pattern.permute.xlu0 0
        %330 = vperm.xlu0 %329, %v287
        %v331 = vpop.permute.xlu0 %330
        %332 = vset.pattern.permute.xlu0 0
        %333 = vperm.xlu0 %332, %v288
        %v334 = vpop.permute.xlu0 %333
        %335 = vset.pattern.permute.xlu0 0
        %336 = vperm.xlu0 %335, %v289
        %v337 = vpop.permute.xlu0 %336
        %vm338 = vcmp.eq.s32.totalorder %v273, %v292
        %vm339 = vcmp.eq.s32.totalorder %v273, %v295
        %vm340 = vcmp.eq.s32.totalorder %v273, %v298
        %vm341 = vcmp.eq.s32.totalorder %v273, %v301
        %vm342 = vcmp.eq.s32.totalorder %v273, %v304
        %vm343 = vcmp.eq.s32.totalorder %v273, %v307
        %vm344 = vcmp.eq.s32.totalorder %v273, %v310
        %vm345 = vcmp.eq.s32.totalorder %v273, %v313
        %vm346 = vcmp.eq.s32.totalorder %v273, %v316
        %vm347 = vcmp.eq.s32.totalorder %v273, %v319
        %vm348 = vcmp.eq.s32.totalorder %v273, %v322
        %vm349 = vcmp.eq.s32.totalorder %v273, %v325
        %vm350 = vcmp.eq.s32.totalorder %v273, %v328
        %vm351 = vcmp.eq.s32.totalorder %v273, %v331
        %vm352 = vcmp.eq.s32.totalorder %v273, %v334
        %vm353 = vcmp.eq.s32.totalorder %v273, %v337
        %v354 = vsel %vm338, 1, 0
        %v355 = vsel %vm339, 1, 0
        %v356 = vsel %vm340, 1, 0
        %v357 = vsel %vm341, 1, 0
        %v358 = vsel %vm342, 1, 0
        %v359 = vsel %vm343, 1, 0
        %v360 = vsel %vm344, 1, 0
        %v361 = vsel %vm345, 1, 0
        %v362 = vsel %vm346, 1, 0
        %v363 = vsel %vm347, 1, 0
        %v364 = vsel %vm348, 1, 0
        %v365 = vsel %vm349, 1, 0
        %v366 = vsel %vm350, 1, 0
        %v367 = vsel %vm351, 1, 0
        %v368 = vsel %vm352, 1, 0
        %v369 = vsel %vm353, 1, 0
        %v370 = vcvt.s32.f32 %v354
        %v371 = vcvt.s32.f32 %v355
        %v372 = vcvt.s32.f32 %v356
        %v373 = vcvt.s32.f32 %v357
        %v374 = vcvt.s32.f32 %v358
        %v375 = vcvt.s32.f32 %v359
        %v376 = vcvt.s32.f32 %v360
        %v377 = vcvt.s32.f32 %v361
        %v378 = vcvt.s32.f32 %v362
        %v379 = vcvt.s32.f32 %v363
        %v380 = vcvt.s32.f32 %v364
        %v381 = vcvt.s32.f32 %v365
        %v382 = vcvt.s32.f32 %v366
        %v383 = vcvt.s32.f32 %v367
        %v384 = vcvt.s32.f32 %v368
        %v385 = vcvt.s32.f32 %v369
        %v386 = vld [vmem:[%s265] sm:$0xff]
        %v387 = vld [vmem:[%s265 + $0x8] sm:$0xff]
        %vm388 = vcmask 130048
        %v390 = vsel %vm388, %v370, 0
        %v393 = vsel %vm388, %v371, 0
        %v396 = vsel %vm388, %v372, 0
        %v399 = vsel %vm388, %v373, 0
        %v402 = vsel %vm388, %v374, 0
        %v405 = vsel %vm388, %v375, 0
        %v408 = vsel %vm388, %v376, 0
        %v411 = vsel %vm388, %v377, 0
        %v414 = vsel %vm388, %v378, 0
        %v417 = vsel %vm388, %v379, 0
        %v420 = vsel %vm388, %v380, 0
        %v423 = vsel %vm388, %v381, 0
        %v426 = vsel %vm388, %v382, 0
        %v429 = vsel %vm388, %v383, 0
        %v432 = vsel %vm388, %v384, 0
        %v435 = vsel %vm388, %v385, 0
        %437 = vmatprep.subr.mxu0 0.0
        %438 = vmatpush1.msra.mxu0 %v386
        %439 = vmatprep.subr.mxu0 0.0
        %440 = vmatpush1.msra.mxu0 %v387
        %441 = vmatprep.subr.mxu0 0.0
        %442 = vmatpush1.msra.mxu0 0.0
        %443 = vmatprep.subr.mxu0 0.0
        %444 = vmatpush1.msra.mxu0 0.0
        %445 = vmatprep.subr.mxu0 0.0
        %446 = vmatpush1.msra.mxu0 0.0
        %447 = vmatprep.subr.mxu0 0.0
        %448 = vmatpush1.msra.mxu0 0.0
        %449 = vmatprep.subr.mxu0 0.0
        %450 = vmatpush1.msra.mxu0 0.0
        %451 = vmatprep.subr.mxu0 0.0
        %452 = vmatpush1.msra.mxu0 0.0
        %453 = vmatprep.subr.mxu0 0.0
        %454 = vmatpush1.msra.mxu0 0.0
        %455 = vmatprep.subr.mxu0 0.0
        %456 = vmatpush1.msra.mxu0 0.0
        %457 = vmatprep.subr.mxu0 0.0
        %458 = vmatpush1.msra.mxu0 0.0
        %459 = vmatprep.subr.mxu0 0.0
        %460 = vmatpush1.msra.mxu0 0.0
        %461 = vmatprep.subr.mxu0 0.0
        %462 = vmatpush1.msra.mxu0 0.0
        %463 = vmatprep.subr.mxu0 0.0
        %464 = vmatpush1.msra.mxu0 0.0
        %465 = vmatprep.subr.mxu0 0.0
        %466 = vmatpush1.msra.mxu0 0.0
        %467 = vmatprep.subr.mxu0 0.0
        %468 = vmatpush1.msra.mxu0 0.0
        %469 = vmatprep.subr.mxu0 0.0
        %470 = vmatpush1.msra.mxu0 0.0
        %471 = vmatprep.subr.mxu0 0.0
        %472 = vmatpush1.msra.mxu0 0.0
        %473 = vmatprep.subr.mxu0 0.0
        %474 = vmatpush1.msra.mxu0 0.0
        %475 = vmatprep.subr.mxu0 0.0
        %476 = vmatpush1.msra.mxu0 0.0
        %477 = vmatprep.subr.mxu0 0.0
        %478 = vmatpush1.msra.mxu0 0.0
        %479 = vmatprep.subr.mxu0 0.0
        %480 = vmatpush1.msra.mxu0 0.0
        %481 = vmatprep.subr.mxu0 0.0
        %482 = vmatpush1.msra.mxu0 0.0
        %483 = vmatprep.subr.mxu0 0.0
        %484 = vmatpush1.msra.mxu0 0.0
        %485 = vmatprep.subr.mxu0 0.0
        %486 = vmatpush1.msra.mxu0 0.0
        %487 = vmatprep.subr.mxu0 0.0
        %488 = vmatpush1.msra.mxu0 0.0
        %489 = vmatprep.subr.mxu0 0.0
        %490 = vmatpush1.msra.mxu0 0.0
        %491 = vmatprep.subr.mxu0 0.0
        %492 = vmatpush1.msra.mxu0 0.0
        %493 = vmatprep.subr.mxu0 0.0
        %494 = vmatpush1.msra.mxu0 0.0
        %495 = vmatprep.subr.mxu0 0.0
        %496 = vmatpush1.msra.mxu0 0.0
        %497 = vmatprep.subr.mxu0 0.0
        %498 = vmatpush1.msra.mxu0 0.0
        %499 = vmatprep.subr.mxu0 0.0
        %500 = vmatpush1.msra.mxu0 0.0
        %501 = vmatprep.mubr.f32.mxu0 0.0
        %502 = vmatmul.mubr.f32.gmra.mrb[0].mxu0 %v390
        %v503 = vpop.f32.mrb[0].mxu0
        %v504 = vadd.f32 0.0, %v503
        %v505 = vpop.f32.mrb[0].mxu0
        %506 = vmatprep.mubr.f32.mxu0 0.0
        %507 = vmatmul.mubr.f32.gmra.mrb[0].mxu0 %v393
        %v508 = vpop.f32.mrb[0].mxu0
        %v509 = vadd.f32 0.0, %v508
        %v510 = vpop.f32.mrb[0].mxu0
        %511 = vmatprep.mubr.f32.mxu0 0.0
        %512 = vmatmul.mubr.f32.gmra.mrb[0].mxu0 %v396
        %v513 = vpop.f32.mrb[0].mxu0
        %v514 = vadd.f32 0.0, %v513
        %v515 = vpop.f32.mrb[0].mxu0
        %516 = vmatprep.mubr.f32.mxu0 0.0
        %517 = vmatmul.mubr.f32.gmra.mrb[0].mxu0 %v399
        %v518 = vpop.f32.mrb[0].mxu0
        %v519 = vadd.f32 0.0, %v518
        %v520 = vpop.f32.mrb[0].mxu0
        %521 = vmatprep.mubr.f32.mxu0 0.0
        %522 = vmatmul.mubr.f32.gmra.mrb[0].mxu0 %v402
        %v523 = vpop.f32.mrb[0].mxu0
        %v524 = vadd.f32 0.0, %v523
        %v525 = vpop.f32.mrb[0].mxu0
        %526 = vmatprep.mubr.f32.mxu0 0.0
        %527 = vmatmul.mubr.f32.gmra.mrb[0].mxu0 %v405
        %v528 = vpop.f32.mrb[0].mxu0
        %v529 = vadd.f32 0.0, %v528
        %v530 = vpop.f32.mrb[0].mxu0
        %531 = vmatprep.mubr.f32.mxu0 0.0
        %532 = vmatmul.mubr.f32.gmra.mrb[0].mxu0 %v408
        %v533 = vpop.f32.mrb[0].mxu0
        %v534 = vadd.f32 0.0, %v533
        %v535 = vpop.f32.mrb[0].mxu0
        %536 = vmatprep.mubr.f32.mxu0 0.0
        %537 = vmatmul.mubr.f32.gmra.mrb[0].mxu0 %v411
        %v538 = vpop.f32.mrb[0].mxu0
        %v539 = vadd.f32 0.0, %v538
        %v540 = vpop.f32.mrb[0].mxu0
        %541 = vmatprep.mubr.f32.mxu0 0.0
        %542 = vmatmul.mubr.f32.gmra.mrb[0].mxu0 %v414
        %v543 = vpop.f32.mrb[0].mxu0
        %v544 = vadd.f32 0.0, %v543
        %v545 = vpop.f32.mrb[0].mxu0
        %546 = vmatprep.mubr.f32.mxu0 0.0
        %547 = vmatmul.mubr.f32.gmra.mrb[0].mxu0 %v417
        %v548 = vpop.f32.mrb[0].mxu0
        %v549 = vadd.f32 0.0, %v548
        %v550 = vpop.f32.mrb[0].mxu0
        %551 = vmatprep.mubr.f32.mxu0 0.0
        %552 = vmatmul.mubr.f32.gmra.mrb[0].mxu0 %v420
        %v553 = vpop.f32.mrb[0].mxu0
        %v554 = vadd.f32 0.0, %v553
        %v555 = vpop.f32.mrb[0].mxu0
        %556 = vmatprep.mubr.f32.mxu0 0.0
        %557 = vmatmul.mubr.f32.gmra.mrb[0].mxu0 %v423
        %v558 = vpop.f32.mrb[0].mxu0
        %v559 = vadd.f32 0.0, %v558
        %v560 = vpop.f32.mrb[0].mxu0
        %561 = vmatprep.mubr.f32.mxu0 0.0
        %562 = vmatmul.mubr.f32.gmra.mrb[0].mxu0 %v426
        %v563 = vpop.f32.mrb[0].mxu0
        %v564 = vadd.f32 0.0, %v563
        %v565 = vpop.f32.mrb[0].mxu0
        %566 = vmatprep.mubr.f32.mxu0 0.0
        %567 = vmatmul.mubr.f32.gmra.mrb[0].mxu0 %v429
        %v568 = vpop.f32.mrb[0].mxu0
        %v569 = vadd.f32 0.0, %v568
        %v570 = vpop.f32.mrb[0].mxu0
        %571 = vmatprep.mubr.f32.mxu0 0.0
        %572 = vmatmul.mubr.f32.gmra.mrb[0].mxu0 %v432
        %v573 = vpop.f32.mrb[0].mxu0
        %v574 = vadd.f32 0.0, %v573
        %v575 = vpop.f32.mrb[0].mxu0
        %576 = vmatprep.mubr.f32.mxu0 0.0
        %577 = vmatmul.mubr.f32.gmra.mrb[0].mxu0 %v435
        %v578 = vpop.f32.mrb[0].mxu0
        %v579 = vadd.f32 0.0, %v578
        %v580 = vpop.f32.mrb[0].mxu0
        %581 = vdwg.mxu0
        %v582 = vld [vmem:[%s259] sm:$0xff]
        %v583 = vld [vmem:[%s259 + $0x8] sm:$0xff]
        %v584 = vld [vmem:[%s259 + $0x10] sm:$0xff]
        %v585 = vld [vmem:[%s259 + $0x18] sm:$0xff]
        %v586 = vld [vmem:[%s259 + $0x20] sm:$0xff]
        %v587 = vld [vmem:[%s259 + $0x28] sm:$0xff]
        %v588 = vld [vmem:[%s259 + $0x30] sm:$0xff]
        %v589 = vld [vmem:[%s259 + $0x38] sm:$0xff]
        %v590 = vld [vmem:[%s259 + $0x40] sm:$0xff]
        %v591 = vld [vmem:[%s259 + $0x48] sm:$0xff]
        %v592 = vld [vmem:[%s259 + $0x50] sm:$0xff]
        %v593 = vld [vmem:[%s259 + $0x58] sm:$0xff]
        %v594 = vld [vmem:[%s259 + $0x60] sm:$0xff]
        %v595 = vld [vmem:[%s259 + $0x68] sm:$0xff]
        %v596 = vld [vmem:[%s259 + $0x70] sm:$0xff]
        %v597 = vld [vmem:[%s259 + $0x78] sm:$0xff]
        %599 = vset.pattern.permute.xlu0 0
        %600 = vperm.xlu0 %599, %v582
        %v601 = vpop.permute.xlu0 %600
        %604 = vset.pattern.permute.xlu0 0
        %605 = vperm.xlu0 %604, %v583
        %v606 = vpop.permute.xlu0 %605
        %609 = vset.pattern.permute.xlu0 0
        %610 = vperm.xlu0 %609, %v584
        %v611 = vpop.permute.xlu0 %610
        %614 = vset.pattern.permute.xlu0 0
        %615 = vperm.xlu0 %614, %v585
        %v616 = vpop.permute.xlu0 %615
        %619 = vset.pattern.permute.xlu0 0
        %620 = vperm.xlu0 %619, %v586
        %v621 = vpop.permute.xlu0 %620
        %624 = vset.pattern.permute.xlu0 0
        %625 = vperm.xlu0 %624, %v587
        %v626 = vpop.permute.xlu0 %625
        %629 = vset.pattern.permute.xlu0 0
        %630 = vperm.xlu0 %629, %v588
        %v631 = vpop.permute.xlu0 %630
        %634 = vset.pattern.permute.xlu0 0
        %635 = vperm.xlu0 %634, %v589
        %v636 = vpop.permute.xlu0 %635
        %639 = vset.pattern.permute.xlu0 0
        %640 = vperm.xlu0 %639, %v590
        %v641 = vpop.permute.xlu0 %640
        %644 = vset.pattern.permute.xlu0 0
        %645 = vperm.xlu0 %644, %v591
        %v646 = vpop.permute.xlu0 %645
        %649 = vset.pattern.permute.xlu0 0
        %650 = vperm.xlu0 %649, %v592
        %v651 = vpop.permute.xlu0 %650
        %654 = vset.pattern.permute.xlu0 0
        %655 = vperm.xlu0 %654, %v593
        %v656 = vpop.permute.xlu0 %655
        %659 = vset.pattern.permute.xlu0 0
        %660 = vperm.xlu0 %659, %v594
        %v661 = vpop.permute.xlu0 %660
        %664 = vset.pattern.permute.xlu0 0
        %665 = vperm.xlu0 %664, %v595
        %v666 = vpop.permute.xlu0 %665
        %669 = vset.pattern.permute.xlu0 0
        %670 = vperm.xlu0 %669, %v596
        %v671 = vpop.permute.xlu0 %670
        %674 = vset.pattern.permute.xlu0 0
        %675 = vperm.xlu0 %674, %v597
        %v676 = vpop.permute.xlu0 %675
        %v678 = vmul.f32 %v504, %v601
        %v679 = vmul.f32 %v509, %v606
        %v680 = vmul.f32 %v514, %v611
        %v681 = vmul.f32 %v519, %v616
        %v682 = vmul.f32 %v524, %v621
        %v683 = vmul.f32 %v529, %v626
        %v684 = vmul.f32 %v534, %v631
        %v685 = vmul.f32 %v539, %v636
        %v686 = vmul.f32 %v544, %v641
        %v687 = vmul.f32 %v549, %v646
        %v688 = vmul.f32 %v554, %v651
        %v689 = vmul.f32 %v559, %v656
        %v690 = vmul.f32 %v564, %v661
        %v691 = vmul.f32 %v569, %v666
        %v692 = vmul.f32 %v574, %v671
        %v693 = vmul.f32 %v579, %v676
        %v694 = vlaneseq
        %v695 = vshrl.u32 %v694, 7
        %v696 = vadd.s32 %v695, 8
        %v697 = vld [vmem:[%s254] sm:$0x1]
        %v698 = vlaneseq
        %v699 = vshrl.u32 %v698, 7
        %v700 = vsub.s32 0, %v699
        %v701 = vrot.slane %v697, %v700
        %vm702 = vcmp.eq.s32.totalorder %v695, %v701
        %vm703 = vcmp.eq.s32.totalorder %v696, %v701
        %v704 = vsel %vm702, 1, 0
        %v705 = vsel %vm703, 1, 0
        %v706 = vcvt.s32.f32 %v704
        %v707 = vcvt.s32.f32 %v705
        %v708 = vld [vmem:[%s245] sm:$0xff]
        %v709 = vld [vmem:[%s245 + $0x8] sm:$0xff]
        %710 = vmatprep.subr.mxu0 0.0
        %711 = vmatpush1.msra.mxu0 %v678
        %712 = vmatprep.subr.mxu0 0.0
        %713 = vmatpush1.msra.mxu0 %v679
        %714 = vmatprep.subr.mxu0 0.0
        %715 = vmatpush1.msra.mxu0 %v680
        %716 = vmatprep.subr.mxu0 0.0
        %717 = vmatpush1.msra.mxu0 %v681
        %718 = vmatprep.subr.mxu0 0.0
        %719 = vmatpush1.msra.mxu0 %v682
        %720 = vmatprep.subr.mxu0 0.0
        %721 = vmatpush1.msra.mxu0 %v683
        %722 = vmatprep.subr.mxu0 0.0
        %723 = vmatpush1.msra.mxu0 %v684
        %724 = vmatprep.subr.mxu0 0.0
        %725 = vmatpush1.msra.mxu0 %v685
        %726 = vmatprep.subr.mxu0 0.0
        %727 = vmatpush1.msra.mxu0 %v686
        %728 = vmatprep.subr.mxu0 0.0
        %729 = vmatpush1.msra.mxu0 %v687
        %730 = vmatprep.subr.mxu0 0.0
        %731 = vmatpush1.msra.mxu0 %v688
        %732 = vmatprep.subr.mxu0 0.0
        %733 = vmatpush1.msra.mxu0 %v689
        %734 = vmatprep.subr.mxu0 0.0
        %735 = vmatpush1.msra.mxu0 %v690
        %736 = vmatprep.subr.mxu0 0.0
        %737 = vmatpush1.msra.mxu0 %v691
        %738 = vmatprep.subr.mxu0 0.0
        %739 = vmatpush1.msra.mxu0 %v692
        %740 = vmatprep.subr.mxu0 0.0
        %741 = vmatpush1.msra.mxu0 %v693
        %742 = vmatprep.subr.mxu0 0.0
        %743 = vmatpush1.msra.mxu0 0.0
        %744 = vmatprep.subr.mxu0 0.0
        %745 = vmatpush1.msra.mxu0 0.0
        %746 = vmatprep.subr.mxu0 0.0
        %747 = vmatpush1.msra.mxu0 0.0
        %748 = vmatprep.subr.mxu0 0.0
        %749 = vmatpush1.msra.mxu0 0.0
        %750 = vmatprep.subr.mxu0 0.0
        %751 = vmatpush1.msra.mxu0 0.0
        %752 = vmatprep.subr.mxu0 0.0
        %753 = vmatpush1.msra.mxu0 0.0
        %754 = vmatprep.subr.mxu0 0.0
        %755 = vmatpush1.msra.mxu0 0.0
        %756 = vmatprep.subr.mxu0 0.0
        %757 = vmatpush1.msra.mxu0 0.0
        %758 = vmatprep.subr.mxu0 0.0
        %759 = vmatpush1.msra.mxu0 0.0
        %760 = vmatprep.subr.mxu0 0.0
        %761 = vmatpush1.msra.mxu0 0.0
        %762 = vmatprep.subr.mxu0 0.0
        %763 = vmatpush1.msra.mxu0 0.0
        %764 = vmatprep.subr.mxu0 0.0
        %765 = vmatpush1.msra.mxu0 0.0
        %766 = vmatprep.subr.mxu0 0.0
        %767 = vmatpush1.msra.mxu0 0.0
        %768 = vmatprep.subr.mxu0 0.0
        %769 = vmatpush1.msra.mxu0 0.0
        %770 = vmatprep.subr.mxu0 0.0
        %771 = vmatpush1.msra.mxu0 0.0
        %772 = vmatprep.subr.mxu0 0.0
        %773 = vmatpush1.msra.mxu0 0.0
        %774 = vmatprep.mubr.f32.mxu0 0.0
        %775 = vmatmul.mubr.f32.gmra.mrb[0].mxu0 %v706
        %v776 = vpop.f32.mrb[0].mxu0
        %v777 = vadd.f32 0.0, %v776
        %v778 = vpop.f32.mrb[0].mxu0
        %779 = vmatprep.mubr.f32.mxu0 0.0
        %780 = vmatmul.mubr.f32.gmra.mrb[0].mxu0 %v707
        %v781 = vpop.f32.mrb[0].mxu0
        %v782 = vadd.f32 0.0, %v781
        %v783 = vpop.f32.mrb[0].mxu0
        %784 = vdwg.mxu0
        %v785 = vadd.f32 %v708, %v777
        %v786 = vadd.f32 %v709, %v782
        %787 = vst [vmem:[%s245] sm:$0xff] %v785
        %788 = vst [vmem:[%s245 + $0x8] sm:$0xff] %v786
        %s789 = sand.u32 %s142, 1
        %s790 = scalar_lea.sflag [#allocation3], %s789
        %s791 = sand.u32 %s142, 1
        %s792 = smul.addr %s791, 16
        %s793 = scalar_lea.vmem [#allocation2], %s792
        // Predicated region
        $region41: #{tpu_custom_call.1} parent=35 // pred_check
          %p794 = pneg %p152
        $region42: #{tpu_custom_call.1} parent=35 // pred_check_branch
          %796 = sbr.rel (%p794) target = $region44
        $region43: #{tpu_custom_call.1} parent=35 // pred_region
          %s798 = ssub.s32 256, 256
          %799 = vsyncadd %s790, %s798
          %s800 = smul.addr %s22, 2
          %s801 = smul.addr %s800, 128
          %s802 = scalar_lea.hbm %s4, %s801
          %s803 = sshll.u32 %s793, 4
          %s804 = int_to_ptr.vmem [resolvable:$true] %s803
          %809 = dma.vmem_to_hbm [thread:$0]  %s804, 256, %s802, %s790, 128, 128, 8
        $region44: #{tpu_custom_call.1} parent=35 // pred_fallthru
          _
      $region36: #{tpu_custom_call.1} parent=5 // pred_fallthru
        _
      %p810 = scmp.le.s32.totalorder 2, %s13
      // Predicated region
      $region45: #{tpu_custom_call.1} parent=5 // pred_check
        %p811 = pneg %p810
      $region46: #{tpu_custom_call.1} parent=5 // pred_check_branch
        %813 = sbr.rel (%p811) target = $region48
      $region47: #{tpu_custom_call.1} parent=5 // pred_region
        %s814 = ssub.s32 %s13, 2
        // Predicated region
        $region49: #{tpu_custom_call.1} parent=47 // pred_check
          %p815 = pneg %p158
        $region50: #{tpu_custom_call.1} parent=47 // pred_check_branch
          %817 = sbr.rel (%p815) target = $region52
        $region51: #{tpu_custom_call.1} parent=47 // pred_region
          %s818 = sand.u32 %s143, 1
          %s819 = scalar_lea.sflag [#allocation3], %s818
          %s820 = sand.u32 %s143, 1
          %s821 = smul.addr %s820, 16
          %s822 = scalar_lea.vmem [#allocation2], %s821
          %823 = dma.done %s819, 256
        $region52: #{tpu_custom_call.1} parent=47 // pred_fallthru
          _
      $region48: #{tpu_custom_call.1} parent=5 // pred_fallthru
        _
    $region6: #{tpu_custom_call.1} parent=1 // loop_footer
      %s17 = sadd.s32 1, %s13
    $region7: #{tpu_custom_call.1} parent=1 // loop_footer_branch
      %12 = sbr.rel target = $region3
    $region8: #{tpu_custom_call.1} parent=1 // loop_exit
      _
    %824 = vsyncpa [#allocation3], 1
    %s825 = scalar_lea.sflag [#allocation3], 1
    %826 = vsyncpa %s825, 1

</llo_original>
